<compile_context>
chip_gen: v6e
topology: v6e:2x2x1
jax: 0.10.0
libtpu: 0.0.40
codegen_flags: <defaults>
</compile_context>

<pallas_src>
import functools

import jax
import jax.numpy as jnp
from jax.experimental import pallas as pl
from jax.experimental.pallas import tpu as pltpu

_LANE = 128
_SUB = 8
_CHUNK = _LANE * _SUB  # 1024 elements per (8, 128) vreg-shaped slab


def _psnr_kernel(x_ref, y_ref, o_ref, max_s, min_s, sse_s, *, inv_n):
    # x_ref / y_ref: (1, tg, 8, 128) block of the current batch item.
    k = pl.program_id(1)

    x = x_ref[...].astype(jnp.float32)
    y = y_ref[...].astype(jnp.float32)
    d = x - y

    # Reduce the leading (block) axes only: pure elementwise VPU work over the
    # tg vreg-shaped slabs, result stays (8, 128) lane-wide.
    tile_max = jnp.max(y, axis=(0, 1))
    tile_min = jnp.min(y, axis=(0, 1))
    tile_sse = jnp.sum(d * d, axis=(0, 1))

    @pl.when(k == 0)
    def _():
        max_s[...] = jnp.full(max_s.shape, -jnp.inf, dtype=max_s.dtype)
        min_s[...] = jnp.full(min_s.shape, jnp.inf, dtype=min_s.dtype)
        sse_s[...] = jnp.zeros(sse_s.shape, dtype=sse_s.dtype)

    max_s[...] = jnp.maximum(max_s[...], tile_max)
    min_s[...] = jnp.minimum(min_s[...], tile_min)
    sse_s[...] = sse_s[...] + tile_sse

    @pl.when(k == pl.num_programs(1) - 1)
    def _():
        # Single cross-lane/sublane reduction per batch item (epilogue only).
        mx = jnp.max(max_s[...], keepdims=True)   # (1, 1)
        mn = jnp.min(min_s[...], keepdims=True)   # (1, 1)
        sse = jnp.sum(sse_s[...], keepdims=True)  # (1, 1)
        data_range = mx - mn
        mse = sse * jnp.float32(inv_n)
        val = -10.0 * jnp.log10((data_range * data_range) / mse)  # (1, 1)
        o_ref[...] = jnp.broadcast_to(
            val.reshape(1, 1, 1), o_ref.shape).astype(o_ref.dtype)


def psnr_pallas(x, y, *, target_block_bytes=2 * 1024 * 1024):
    """x, y: (B, ...) arrays (e.g. NCHW). Returns (B,) float32 PSNR (module sign)."""
    assert x.shape[0] == y.shape[0], "batch dims must match"
    B = x.shape[0]
    xf = x.reshape(B, -1)   # keep native dtype; cast happens per-tile in-kernel
    yf = y.reshape(B, -1)
    F = yf.shape[1]
    assert xf.shape[1] == F, "x and y must have the same per-batch numel"

    # Pad the feature axis up to a multiple of 1024 so each row splits into
    # whole (8, 128) slabs. Pad both x and y with y's first element per row:
    # the squared error of the padding is 0 and max/min of y are unchanged.
    Fp = ((F + _CHUNK - 1) // _CHUNK) * _CHUNK
    if Fp != F:
        pad = Fp - F
        fill = yf[:, :1]
        yf = jnp.concatenate([yf, jnp.broadcast_to(fill, (B, pad))], axis=1)
        xf = jnp.concatenate(
            [xf, jnp.broadcast_to(fill.astype(xf.dtype), (B, pad))], axis=1)

    G = Fp // _CHUNK
    x4 = xf.reshape(B, G, _SUB, _LANE)
    y4 = yf.reshape(B, G, _SUB, _LANE)

    # Feature tile: largest divisor of G whose per-input block is <= target
    # (~2 MiB => ~90% of HBM roofline while 2 inputs x 2 buffers stays small).
    elt = max(jnp.dtype(x4.dtype).itemsize, jnp.dtype(y4.dtype).itemsize)
    tg_max = max(1, target_block_bytes // (_CHUNK * elt))
    tg = 1
    for t in range(min(G, tg_max), 0, -1):
        if G % t == 0:
            tg = t
            break
    # TODO(synk): if G is prime/poorly composite and large, pad G to a nicer
    # multiple instead of falling back to small tiles.

    grid = (B, G // tg)

    block_bytes = tg * _CHUNK * (
        jnp.dtype(x4.dtype).itemsize + jnp.dtype(y4.dtype).itemsize)
    # 2 pipeline buffers per input + scratch/output slack; 32 MiB fits every
    # generation's scoped VMEM (v5e default is 16 MiB, v7x physical is 64 MiB).
    vmem_limit = int(min(64 * 1024 * 1024,
                         max(32 * 1024 * 1024, 2 * block_bytes + (4 << 20))))

    out = pl.pallas_call(
        functools.partial(_psnr_kernel, inv_n=1.0 / float(F)),
        out_shape=jax.ShapeDtypeStruct((B, 1, _LANE), jnp.float32),
        grid_spec=pltpu.PrefetchScalarGridSpec(
            num_scalar_prefetch=0,
            grid=grid,
            in_specs=[
                pl.BlockSpec((1, tg, _SUB, _LANE), lambda b, k: (b, k, 0, 0)),
                pl.BlockSpec((1, tg, _SUB, _LANE), lambda b, k: (b, k, 0, 0)),
            ],
            out_specs=pl.BlockSpec((1, 1, _LANE), lambda b, k: (b, 0, 0)),
            scratch_shapes=[
                pltpu.VMEM((_SUB, _LANE), jnp.float32),   # running max(y)
                pltpu.VMEM((_SUB, _LANE), jnp.float32),   # running min(y)
                pltpu.VMEM((_SUB, _LANE), jnp.float32),   # running sum((x-y)^2)
            ],
        ),
        compiler_params=pltpu.CompilerParams(
            dimension_semantics=("parallel", "arbitrary"),
            vmem_limit_bytes=vmem_limit,
        ),
        cost_estimate=pl.CostEstimate(
            flops=5 * B * Fp,
            transcendentals=B,
            bytes_accessed=B * Fp * (jnp.dtype(x4.dtype).itemsize
                                     + jnp.dtype(y4.dtype).itemsize)
                           + B * _LANE * 4,
        ),
    )(x4, y4)
    return out[:, 0, 0]


def psnr_ref(x, y):
    B = x.shape[0]
    xf = x.reshape(B, -1).astype(jnp.float32)
    yf = y.reshape(B, -1).astype(jnp.float32)
    data_range = jnp.max(yf, axis=1) - jnp.min(yf, axis=1)
    sse = jnp.sum((xf - yf) ** 2, axis=1)
    mse = sse / xf.shape[1]
    return -10.0 * jnp.log10(data_range ** 2 / mse)


if __name__ == "__main__":
    key = jax.random.PRNGKey(0)
    kx, ky = jax.random.split(key)
    B, C, H, W = 2, 4, 16, 16          # F = C*H*W = 1024
    x = jax.random.uniform(kx, (B, C, H, W), dtype=jnp.float32)
    y = jax.random.uniform(ky, (B, C, H, W), dtype=jnp.float32)

    out = jax.block_until_ready(psnr_pallas(x, y))
    ref = psnr_ref(x, y)
    assert out.shape == (B,), out.shape
    assert jnp.allclose(out, ref, rtol=1e-5, atol=1e-5), (out, ref)
    print("KERNEL_OK")
</pallas_src>

<mosaic_0001>
module attributes {stable_mosaic.version = 11 : i64} {
  func.func @_psnr_kernel(%arg0: i32, %arg1: i32, %arg2: memref<1x1x8x128xf32, #tpu.memory_space<vmem>>, %arg3: memref<1x1x8x128xf32, #tpu.memory_space<vmem>>, %arg4: memref<1x1x128xf32, #tpu.memory_space<vmem>>, %arg5: memref<8x128xf32, #tpu.memory_space<vmem>>, %arg6: memref<8x128xf32, #tpu.memory_space<vmem>>, %arg7: memref<8x128xf32, #tpu.memory_space<vmem>>) attributes {dimension_semantics = [#tpu.dimension_semantics<parallel>, #tpu.dimension_semantics<arbitrary>], iteration_bounds = array<i64: 2, 1>, scalar_prefetch = 0 : i64, scratch_operands = 3 : i64, tpu.core_type = #tpu.core_type<tc>, window_params = [{transform_indices = @transform_0, window_bounds = array<i64: 1, 1, 8, 128>}, {transform_indices = @transform_1, window_bounds = array<i64: 1, 1, 8, 128>}, {transform_indices = @transform_2, window_bounds = array<i64: 1, 1, 128>}]} {
    %c0 = arith.constant 0 : index
    %c0_0 = arith.constant 0 : index
    %c0_1 = arith.constant 0 : index
    %c0_2 = arith.constant 0 : index
    %0 = vector.load %arg2[%c0, %c0_0, %c0_1, %c0_2] : memref<1x1x8x128xf32, #tpu.memory_space<vmem>>, vector<1x1x8x128xf32>
    %c0_3 = arith.constant 0 : index
    %c0_4 = arith.constant 0 : index
    %c0_5 = arith.constant 0 : index
    %c0_6 = arith.constant 0 : index
    %1 = vector.load %arg3[%c0_3, %c0_4, %c0_5, %c0_6] : memref<1x1x8x128xf32, #tpu.memory_space<vmem>>, vector<1x1x8x128xf32>
    %2 = arith.subf %0, %1 : vector<1x1x8x128xf32>
    %cst = arith.constant dense<0xFF800000> : vector<8x128xf32>
    %3 = vector.multi_reduction <maximumf>, %1, %cst [0, 1] : vector<1x1x8x128xf32> to vector<8x128xf32>
    %cst_7 = arith.constant dense<0x7F800000> : vector<8x128xf32>
    %4 = vector.multi_reduction <minimumf>, %1, %cst_7 [0, 1] : vector<1x1x8x128xf32> to vector<8x128xf32>
    %5 = arith.mulf %2, %2 : vector<1x1x8x128xf32>
    %cst_8 = arith.constant dense<0.000000e+00> : vector<8x128xf32>
    %6 = vector.multi_reduction <add>, %5, %cst_8 [0, 1] : vector<1x1x8x128xf32> to vector<8x128xf32>
    %c0_i32 = arith.constant 0 : i32
    %7 = arith.cmpi eq, %arg1, %c0_i32 : i32
    %8 = arith.extui %7 : i1 to i32
    %c0_i32_9 = arith.constant 0 : i32
    %9 = arith.cmpi ne, %8, %c0_i32_9 : i32
    scf.if %9 {
      %cst_24 = arith.constant 0xFF800000 : f32
      %22 = vector.broadcast %cst_24 : f32 to vector<8x128xf32>
      %c0_25 = arith.constant 0 : index
      %c0_26 = arith.constant 0 : index
      %23 = vector.load %arg5[%c0_25, %c0_26] : memref<8x128xf32, #tpu.memory_space<vmem>>, vector<8x128xf32>
      tpu.vector_store %arg5[%c0_25, %c0_26], %22 {strides = array<i32>} : memref<8x128xf32, #tpu.memory_space<vmem>>, vector<8x128xf32>,
      %cst_27 = arith.constant 0x7F800000 : f32
      %24 = vector.broadcast %cst_27 : f32 to vector<8x128xf32>
      %c0_28 = arith.constant 0 : index
      %c0_29 = arith.constant 0 : index
      %25 = vector.load %arg6[%c0_28, %c0_29] : memref<8x128xf32, #tpu.memory_space<vmem>>, vector<8x128xf32>
      tpu.vector_store %arg6[%c0_28, %c0_29], %24 {strides = array<i32>} : memref<8x128xf32, #tpu.memory_space<vmem>>, vector<8x128xf32>,
      %cst_30 = arith.constant 0.000000e+00 : f32
      %26 = vector.broadcast %cst_30 : f32 to vector<8x128xf32>
      %c0_31 = arith.constant 0 : index
      %c0_32 = arith.constant 0 : index
      %27 = vector.load %arg7[%c0_31, %c0_32] : memref<8x128xf32, #tpu.memory_space<vmem>>, vector<8x128xf32>
      tpu.vector_store %arg7[%c0_31, %c0_32], %26 {strides = array<i32>} : memref<8x128xf32, #tpu.memory_space<vmem>>, vector<8x128xf32>,
    } else {
    }
    %c0_10 = arith.constant 0 : index
    %c0_11 = arith.constant 0 : index
    %10 = vector.load %arg5[%c0_10, %c0_11] : memref<8x128xf32, #tpu.memory_space<vmem>>, vector<8x128xf32>
    %11 = arith.maximumf %10, %3 : vector<8x128xf32>
    %c0_12 = arith.constant 0 : index
    %c0_13 = arith.constant 0 : index
    %12 = vector.load %arg5[%c0_12, %c0_13] : memref<8x128xf32, #tpu.memory_space<vmem>>, vector<8x128xf32>
    tpu.vector_store %arg5[%c0_12, %c0_13], %11 {strides = array<i32>} : memref<8x128xf32, #tpu.memory_space<vmem>>, vector<8x128xf32>,
    %c0_14 = arith.constant 0 : index
    %c0_15 = arith.constant 0 : index
    %13 = vector.load %arg6[%c0_14, %c0_15] : memref<8x128xf32, #tpu.memory_space<vmem>>, vector<8x128xf32>
    %14 = arith.minimumf %13, %4 : vector<8x128xf32>
    %c0_16 = arith.constant 0 : index
    %c0_17 = arith.constant 0 : index
    %15 = vector.load %arg6[%c0_16, %c0_17] : memref<8x128xf32, #tpu.memory_space<vmem>>, vector<8x128xf32>
    tpu.vector_store %arg6[%c0_16, %c0_17], %14 {strides = array<i32>} : memref<8x128xf32, #tpu.memory_space<vmem>>, vector<8x128xf32>,
    %c0_18 = arith.constant 0 : index
    %c0_19 = arith.constant 0 : index
    %16 = vector.load %arg7[%c0_18, %c0_19] : memref<8x128xf32, #tpu.memory_space<vmem>>, vector<8x128xf32>
    %17 = arith.addf %16, %6 : vector<8x128xf32>
    %c0_20 = arith.constant 0 : index
    %c0_21 = arith.constant 0 : index
    %18 = vector.load %arg7[%c0_20, %c0_21] : memref<8x128xf32, #tpu.memory_space<vmem>>, vector<8x128xf32>
    tpu.vector_store %arg7[%c0_20, %c0_21], %17 {strides = array<i32>} : memref<8x128xf32, #tpu.memory_space<vmem>>, vector<8x128xf32>,
    %c0_i32_22 = arith.constant 0 : i32
    %19 = arith.cmpi eq, %arg1, %c0_i32_22 : i32
    %20 = arith.extui %19 : i1 to i32
    %c0_i32_23 = arith.constant 0 : i32
    %21 = arith.cmpi ne, %20, %c0_i32_23 : i32
    scf.if %21 {
      %c0_24 = arith.constant 0 : index
      %c0_25 = arith.constant 0 : index
      %22 = vector.load %arg5[%c0_24, %c0_25] : memref<8x128xf32, #tpu.memory_space<vmem>>, vector<8x128xf32>
      %23 = vector.shape_cast %22 : vector<8x128xf32> to vector<1x8x128xf32>
      %cst_26 = arith.constant dense<0xFF800000> : vector<1xf32>
      %24 = vector.multi_reduction <maximumf>, %23, %cst_26 [1, 2] : vector<1x8x128xf32> to vector<1xf32>
      %25 = vector.shape_cast %24 : vector<1xf32> to vector<1x1x1xf32>
      %26 = vector.extract %25[0, 0, 0] : f32 from vector<1x1x1xf32>
      %27 = vector.broadcast %26 : f32 to vector<1x1xf32>
      %c0_27 = arith.constant 0 : index
      %c0_28 = arith.constant 0 : index
      %28 = vector.load %arg6[%c0_27, %c0_28] : memref<8x128xf32, #tpu.memory_space<vmem>>, vector<8x128xf32>
      %29 = vector.shape_cast %28 : vector<8x128xf32> to vector<1x8x128xf32>
      %cst_29 = arith.constant dense<0x7F800000> : vector<1xf32>
      %30 = vector.multi_reduction <minimumf>, %29, %cst_29 [1, 2] : vector<1x8x128xf32> to vector<1xf32>
      %31 = vector.shape_cast %30 : vector<1xf32> to vector<1x1x1xf32>
      %32 = vector.extract %31[0, 0, 0] : f32 from vector<1x1x1xf32>
      %33 = vector.broadcast %32 : f32 to vector<1x1xf32>
      %c0_30 = arith.constant 0 : index
      %c0_31 = arith.constant 0 : index
      %34 = vector.load %arg7[%c0_30, %c0_31] : memref<8x128xf32, #tpu.memory_space<vmem>>, vector<8x128xf32>
      %35 = vector.shape_cast %34 : vector<8x128xf32> to vector<1x8x128xf32>
      %cst_32 = arith.constant dense<0.000000e+00> : vector<1xf32>
      %36 = vector.multi_reduction <add>, %35, %cst_32 [1, 2] : vector<1x8x128xf32> to vector<1xf32>
      %37 = vector.shape_cast %36 : vector<1xf32> to vector<1x1x1xf32>
      %38 = vector.extract %37[0, 0, 0] : f32 from vector<1x1x1xf32>
      %39 = vector.broadcast %38 : f32 to vector<1x1xf32>
      %40 = arith.subf %27, %33 : vector<1x1xf32>
      %cst_33 = arith.constant 9.765625E-4 : f32
      %41 = vector.broadcast %cst_33 : f32 to vector<1x1xf32>
      %42 = arith.mulf %39, %41 : vector<1x1xf32>
      %43 = arith.mulf %40, %40 : vector<1x1xf32>
      %44 = arith.divf %43, %42 : vector<1x1xf32>
      %45 = math.log %44 : vector<1x1xf32>
      %cst_34 = arith.constant 0.434294492 : f32
      %46 = vector.broadcast %cst_34 : f32 to vector<1x1xf32>
      %47 = arith.mulf %45, %46 : vector<1x1xf32>
      %cst_35 = arith.constant -1.000000e+01 : f32
      %48 = vector.broadcast %cst_35 : f32 to vector<1x1xf32>
      %49 = arith.mulf %48, %47 : vector<1x1xf32>
      %50 = vector.shape_cast %49 : vector<1x1xf32> to vector<1x1x1xf32>
      %51 = vector.shape_cast %50 : vector<1x1x1xf32> to vector<1x1x1xf32>
      %52 = vector.broadcast %51 : vector<1x1x1xf32> to vector<1x1x128xf32>
      %c0_36 = arith.constant 0 : index
      %c0_37 = arith.constant 0 : index
      %c0_38 = arith.constant 0 : index
      %53 = vector.load %arg4[%c0_36, %c0_37, %c0_38] : memref<1x1x128xf32, #tpu.memory_space<vmem>>, vector<1x1x128xf32>
      tpu.vector_store %arg4[%c0_36, %c0_37, %c0_38], %52 {strides = array<i32>} : memref<1x1x128xf32, #tpu.memory_space<vmem>>, vector<1x1x128xf32>,
    } else {
    }
    return
  }
  func.func @transform_0(%arg0: i32, %arg1: i32) -> (i32, i32, i32, i32) {
    %c0_i32 = arith.constant 0 : i32
    %c0_i32_0 = arith.constant 0 : i32
    %c0_i32_1 = arith.constant 0 : i32
    return %arg0, %arg1, %c0_i32, %c0_i32_0 : i32, i32, i32, i32
  }
  func.func @transform_1(%arg0: i32, %arg1: i32) -> (i32, i32, i32, i32) {
    %c0_i32 = arith.constant 0 : i32
    %c0_i32_0 = arith.constant 0 : i32
    %c0_i32_1 = arith.constant 0 : i32
    return %arg0, %arg1, %c0_i32, %c0_i32_0 : i32, i32, i32, i32
  }
  func.func @transform_2(%arg0: i32, %arg1: i32) -> (i32, i32, i32) {
    %c0_i32 = arith.constant 0 : i32
    %c0_i32_0 = arith.constant 0 : i32
    %c0_i32_1 = arith.constant 0 : i32
    return %arg0, %c0_i32, %c0_i32_0 : i32, i32, i32
  }
}

</mosaic_0001>

<llo_original>
// kernel: tpu_custom_call.1
$region0: #{tpu_custom_call.1}
  #allocation0 [shape = 'u32[]', space=smem, size = 0x4, offset = 0x4, fixed_abs, tag = 'smem constant byte address 0x4 - core index']
  #allocation1 [shape = 'u32[144,128]{1,0:T(1,128)}', space=vmem, size = 0x12000, scoped, tag = 'internal scratch']
  #allocation2 [shape = 'f32[8,128]{1,0:T(8,128)}', space=vmem, size = 0x1000, scoped, tag = 'scratch operand']
  #allocation3 [shape = 'f32[8,128]{1,0:T(8,128)}', space=vmem, size = 0x1000, scoped, tag = 'scratch operand']
  #allocation4 [shape = 'f32[8,128]{1,0:T(8,128)}', space=vmem, size = 0x1000, scoped, tag = 'scratch operand']
  %s0 = inlined_call_operand.hbm [shape: f32[2,1,8,128], index: 0, kind: input, shape index: {}]
  %s1 = inlined_call_operand.hbm [shape: f32[2,1,8,128], index: 1, kind: input, shape index: {}]
  %s2 = inlined_call_operand.hbm [shape: f32[2,1,128], index: 2, kind: output, shape index: {}]
  %s3 = sld [smem:[#allocation0]]
  $region57: #{tpu_custom_call.1} parent=0
    _
  %s5 = ssub.s32 1, %s3
  %s6 = scalar_select 0, %s5, %s3
  $region1: #{tpu_custom_call.1} parent=0
    #allocation5 [shape = 'u8[8192]{0}', space=vmem, size = 0x2000, scoped, tag = 'input window, operand 0']
    #allocation6 [shape = 's32[2]{0}', space=sflag, size = 0x8, scoped, tag = 'scoped memory for tpu_custom_call.1']
    #allocation7 [shape = 's32[2]{0}', space=sflag, size = 0x8, scoped, tag = 'scoped memory for tpu_custom_call.1']
    #allocation8 [shape = 'u8[8192]{0}', space=vmem, size = 0x2000, scoped, tag = 'input window, operand 1']
    #allocation9 [shape = 's32[2]{0}', space=sflag, size = 0x8, scoped, tag = 'scoped memory for tpu_custom_call.1']
    #allocation10 [shape = 'u8[1024]{0}', space=vmem, size = 0x400, scoped, tag = 'output window, operand 0']
    %7 = vsyncpa [#allocation6], 0
    %s8 = scalar_lea.sflag [#allocation6], 1
    %9 = vsyncpa %s8, 0
    %10 = vsyncpa [#allocation9], 0
    %s11 = scalar_lea.sflag [#allocation9], 1
    %12 = vsyncpa %s11, 0
    %13 = vsyncpa [#allocation7], 0
    %s14 = scalar_lea.sflag [#allocation7], 1
    %15 = vsyncpa %s14, 0
    loop: start=0, step=1, limit=4
    $region2: #{tpu_custom_call.1} parent=1 // loop_pre_header
      _
    $region3: #{tpu_custom_call.1} parent=1 // loop_header
      %s17 = sphi 0, %s21
      %p18 = scmp.ge.s32.totalorder %s17, 4
      %s24 = sphi 0, %s36
      %s25 = sphi 0, %s32
      %s26 = sphi 0, %s24
      %s27 = sphi 0, %s25
      %s28 = sphi 0, %s26
      %s29 = sphi 0, %s27
      %s41 = sphi 0, %s43
      %s44 = sphi 0, %s41
      %s45 = sphi 0, %s44
      %s61 = sphi 0, %s45
      %s69 = sphi 0, %s71
      %s72 = sphi 0, %s69
      %s73 = sphi 0, %s72
      %s89 = sphi 0, %s73
      %s95 = sphi 0, %s97
      %s98 = sphi 0, %s95
      %s99 = sphi 0, %s98
      %s115 = sphi 0, %s99
    $region4: #{tpu_custom_call.1} parent=1 // loop_header_branch
      %20 = sbr.rel (%p18) target = $region8
    $region5: #{tpu_custom_call.1} parent=1 // loop_body
      %s22 = ssub.s32 %s17, 1
      %s23 = ssub.s32 %s17, 2
      %s30 = sadd.s32 1, %s25
      %p31 = scmp.ge.s32.totalorder %s30, 1
      %s32 = scalar_select %p31, 0, %s30
      %s33 = sadd.s32 1, %s24
      %s34 = scalar_select %p31, %s33, %s24
      %p35 = scmp.ge.s32.totalorder %s34, 2
      %s36 = scalar_select %p35, 0, %s34
      %s37 = ssub.s32 %s24, %s36
      %s38 = ssub.s32 %s25, %s32
      %s39 = sor.u32 %s37, %s38
      %p40 = scmp.eq.s32.totalorder %s39, 0
      %s42 = sadd.s32 %s41, 1
      %s43 = scalar_select %p40, %s41, %s42
      %p46 = pneg %p40
      %p47 = scmp.eq.s32.totalorder %s17, 1
      %p48 = por %p46, %p47
      %p49 = scmp.ne.s32.totalorder %s41, %s44
      %p50 = scmp.eq.s32.totalorder %s17, 0
      %p51 = por %p49, %p50
      %p52 = scmp.ne.s32.totalorder %s41, %s44
      %p53 = scmp.eq.s32.totalorder %s22, 1
      %p54 = por %p52, %p53
      %p55 = scmp.ne.s32.totalorder %s44, %s45
      %p56 = scmp.eq.s32.totalorder %s22, 0
      %p57 = por %p55, %p56
      %p58 = scmp.ne.s32.totalorder %s44, %s45
      %p59 = scmp.eq.s32.totalorder %s23, 1
      %p60 = por %p58, %p59
      %p62 = scmp.ne.s32.totalorder %s45, %s61
      %p63 = scmp.eq.s32.totalorder %s23, 0
      %p64 = por %p62, %p63
      %s65 = ssub.s32 %s24, %s36
      %s66 = ssub.s32 %s25, %s32
      %s67 = sor.u32 %s65, %s66
      %p68 = scmp.eq.s32.totalorder %s67, 0
      %s70 = sadd.s32 %s69, 1
      %s71 = scalar_select %p68, %s69, %s70
      %p74 = pneg %p68
      %p75 = scmp.eq.s32.totalorder %s17, 1
      %p76 = por %p74, %p75
      %p77 = scmp.ne.s32.totalorder %s69, %s72
      %p78 = scmp.eq.s32.totalorder %s17, 0
      %p79 = por %p77, %p78
      %p80 = scmp.ne.s32.totalorder %s69, %s72
      %p81 = scmp.eq.s32.totalorder %s22, 1
      %p82 = por %p80, %p81
      %p83 = scmp.ne.s32.totalorder %s72, %s73
      %p84 = scmp.eq.s32.totalorder %s22, 0
      %p85 = por %p83, %p84
      %p86 = scmp.ne.s32.totalorder %s72, %s73
      %p87 = scmp.eq.s32.totalorder %s23, 1
      %p88 = por %p86, %p87
      %p90 = scmp.ne.s32.totalorder %s73, %s89
      %p91 = scmp.eq.s32.totalorder %s23, 0
      %p92 = por %p90, %p91
      %s93 = ssub.s32 %s24, %s36
      %p94 = scmp.eq.s32.totalorder %s93, 0
      %s96 = sadd.s32 %s95, 1
      %s97 = scalar_select %p94, %s95, %s96
      %p100 = pneg %p94
      %p101 = scmp.eq.s32.totalorder %s17, 1
      %p102 = por %p100, %p101
      %p103 = scmp.ne.s32.totalorder %s95, %s98
      %p104 = scmp.eq.s32.totalorder %s17, 0
      %p105 = por %p103, %p104
      %p106 = scmp.ne.s32.totalorder %s95, %s98
      %p107 = scmp.eq.s32.totalorder %s22, 1
      %p108 = por %p106, %p107
      %p109 = scmp.ne.s32.totalorder %s98, %s99
      %p110 = scmp.eq.s32.totalorder %s22, 0
      %p111 = por %p109, %p110
      %p112 = scmp.ne.s32.totalorder %s98, %s99
      %p113 = scmp.eq.s32.totalorder %s23, 1
      %p114 = por %p112, %p113
      %p116 = scmp.ne.s32.totalorder %s99, %s115
      %p117 = scmp.eq.s32.totalorder %s23, 0
      %p118 = por %p116, %p117
      %p119 = scmp.le.s32.totalorder 1, %s17
      %p120 = scmp.lt.s32.totalorder %s17, 3
      %p121 = pnand %p119, %p120
      %p122 = pneg %p121
      // Predicated region
      $region9: #{tpu_custom_call.1} parent=5 // pred_check
        _
      $region10: #{tpu_custom_call.1} parent=5 // pred_check_branch
        %124 = sbr.rel (%p121) target = $region12
      $region11: #{tpu_custom_call.1} parent=5 // pred_region
        %s125 = ssub.s32 %s17, 1
      $region12: #{tpu_custom_call.1} parent=5 // pred_fallthru
        _
      %p126 = scmp.lt.s32.totalorder %s17, 2
      // Predicated region
      $region13: #{tpu_custom_call.1} parent=5 // pred_check
        %p127 = pneg %p126
      $region14: #{tpu_custom_call.1} parent=5 // pred_check_branch
        %129 = sbr.rel (%p127) target = $region16
      $region15: #{tpu_custom_call.1} parent=5 // pred_region
        // Predicated region
        $region17: #{tpu_custom_call.1} parent=15 // pred_check
          %p130 = pneg %p51
        $region18: #{tpu_custom_call.1} parent=15 // pred_check_branch
          %132 = sbr.rel (%p130) target = $region20
        $region19: #{tpu_custom_call.1} parent=15 // pred_region
          %s133 = sand.u32 %s41, 1
          %s134 = scalar_lea.sflag [#allocation6], %s133
          %s135 = sand.u32 %s41, 1
          %s136 = smul.addr %s135, 8
          %s137 = scalar_lea.vmem [#allocation5], %s136
          %s139 = ssub.s32 128, 128
          %140 = vsyncadd %s134, %s139
          %s141 = sadd.s32 %s25, %s24
          %s142 = smul.addr %s141, 128
          %s143 = scalar_lea.hbm %s0, %s142
          %s145 = sshll.u32 %s137, 4
          %s146 = int_to_ptr.vmem [resolvable:$true] %s145
          %148 = dma.hbm_to_vmem [thread:$0]  %s143, 128, %s146, %s134
        $region20: #{tpu_custom_call.1} parent=15 // pred_fallthru
          _
        // Predicated region
        $region21: #{tpu_custom_call.1} parent=15 // pred_check
          %p149 = pneg %p79
        $region22: #{tpu_custom_call.1} parent=15 // pred_check_branch
          %151 = sbr.rel (%p149) target = $region24
        $region23: #{tpu_custom_call.1} parent=15 // pred_region
          %s152 = sand.u32 %s69, 1
          %s153 = scalar_lea.sflag [#allocation9], %s152
          %s154 = sand.u32 %s69, 1
          %s155 = smul.addr %s154, 8
          %s156 = scalar_lea.vmem [#allocation8], %s155
          %s158 = ssub.s32 128, 128
          %159 = vsyncadd %s153, %s158
          %s160 = sadd.s32 %s25, %s24
          %s161 = smul.addr %s160, 128
          %s162 = scalar_lea.hbm %s1, %s161
          %s164 = sshll.u32 %s156, 4
          %s165 = int_to_ptr.vmem [resolvable:$true] %s164
          %167 = dma.hbm_to_vmem [thread:$0]  %s162, 128, %s165, %s153
        $region24: #{tpu_custom_call.1} parent=15 // pred_fallthru
          _
      $region16: #{tpu_custom_call.1} parent=5 // pred_fallthru
        _
      %p168 = scmp.le.s32.totalorder 1, %s17
      %p169 = scmp.lt.s32.totalorder %s17, 3
      %p170 = pnand %p168, %p169
      %p171 = pneg %p170
      // Predicated region
      $region25: #{tpu_custom_call.1} parent=5 // pred_check
        _
      $region26: #{tpu_custom_call.1} parent=5 // pred_check_branch
        %173 = sbr.rel (%p170) target = $region28
      $region27: #{tpu_custom_call.1} parent=5 // pred_region
        %s174 = ssub.s32 %s17, 1
        %s175 = sand.u32 %s44, 1
        %s176 = scalar_lea.sflag [#allocation6], %s175
        %s177 = sand.u32 %s44, 1
        %s178 = smul.addr %s177, 8
        %s179 = scalar_lea.vmem [#allocation5], %s178
        // Predicated region
        $region29: #{tpu_custom_call.1} parent=27 // pred_check
          %p180 = pneg %p57
        $region30: #{tpu_custom_call.1} parent=27 // pred_check_branch
          %182 = sbr.rel (%p180) target = $region32
        $region31: #{tpu_custom_call.1} parent=27 // pred_region
          %183 = dma.done %s176, 128
        $region32: #{tpu_custom_call.1} parent=27 // pred_fallthru
          _
        %s184 = sand.u32 %s72, 1
        %s185 = scalar_lea.sflag [#allocation9], %s184
        %s186 = sand.u32 %s72, 1
        %s187 = smul.addr %s186, 8
        %s188 = scalar_lea.vmem [#allocation8], %s187
        // Predicated region
        $region33: #{tpu_custom_call.1} parent=27 // pred_check
          %p189 = pneg %p85
        $region34: #{tpu_custom_call.1} parent=27 // pred_check_branch
          %191 = sbr.rel (%p189) target = $region36
        $region35: #{tpu_custom_call.1} parent=27 // pred_region
          %192 = dma.done %s185, 128
        $region36: #{tpu_custom_call.1} parent=27 // pred_fallthru
          _
        %s193 = sand.u32 %s44, 1
        %s194 = scalar_lea.sflag [#allocation6], %s193
        %s195 = sand.u32 %s44, 1
        %s196 = smul.addr %s195, 8
        %s197 = scalar_lea.vmem [#allocation5], %s196
        %p198 = pneg %p57
        %p199 = pneg %p54
        %s200 = sand.u32 %s72, 1
        %s201 = scalar_lea.sflag [#allocation9], %s200
        %s202 = sand.u32 %s72, 1
        %s203 = smul.addr %s202, 8
        %s204 = scalar_lea.vmem [#allocation8], %s203
        %p205 = pneg %p85
        %p206 = pneg %p82
        %p207 = pneg %p111
        %p208 = pneg %p108
        %s209 = sand.u32 %s98, 1
        %s210 = scalar_lea.sflag [#allocation7], %s209
        %s211 = sand.u32 %s98, 1
        %s212 = scalar_lea.vmem [#allocation10], %s211
        %v213 = vld [vmem:[%s179] sm:$0xff]
        %v214 = vld [vmem:[%s188] sm:$0xff]
        %v215 = vsub.f32 %v213, %v214
        %v216 = vmul.f32 %v215, %v215
        %v217 = vadd.f32 %v216, 0.0
        %p218 = scmp.eq.s32.totalorder %s27, 0
        // Predicated region
        $region37: #{tpu_custom_call.1} parent=27 // pred_check
          %p219 = pneg %p218
        $region38: #{tpu_custom_call.1} parent=27 // pred_check_branch
          %221 = sbr.rel (%p219) target = $region40
        $region39: #{tpu_custom_call.1} parent=27 // pred_region
          %222 = vst [vmem:[#allocation2] sm:$0xff] -inf
          %223 = vst [vmem:[#allocation3] sm:$0xff] inf
          %224 = vst [vmem:[#allocation4] sm:$0xff] 0.0
        $region40: #{tpu_custom_call.1} parent=27 // pred_fallthru
          _
        %v225 = vld [vmem:[#allocation2] sm:$0xff]
        %v226 = vmax.f32 %v225, %v214
        %227 = vst [vmem:[#allocation2] sm:$0xff] %v226
        %v228 = vld [vmem:[#allocation3] sm:$0xff]
        %v229 = vmin.f32 %v228, %v214
        %230 = vst [vmem:[#allocation3] sm:$0xff] %v229
        %v231 = vld [vmem:[#allocation4] sm:$0xff]
        %v232 = vadd.f32 %v231, %v217
        %233 = vst [vmem:[#allocation4] sm:$0xff] %v232
        // Predicated region
        $region41: #{tpu_custom_call.1} parent=27 // pred_check
          %p234 = pneg %p218
        $region42: #{tpu_custom_call.1} parent=27 // pred_check_branch
          %236 = sbr.rel (%p234) target = $region44
        $region43: #{tpu_custom_call.1} parent=27 // pred_region
          %v237 = vld [vmem:[#allocation2] sm:$0xff]
          %238 = vmax.xlane.f32.xlu0 %v237
          %v239 = vpop.xlane.xlu0 %238
          %v240 = vrot.slane %v239, 4
          %v241 = vmax.f32 %v239, %v240
          %v242 = vrot.slane %v241, 2
          %v243 = vmax.f32 %v241, %v242
          %v244 = vrot.slane %v243, 1
          %v245 = vmax.f32 %v243, %v244
          %s246 = vtos %v245
          %v247 = vstv %s246
          %v248 = vld [vmem:[#allocation3] sm:$0xff]
          %249 = vmin.xlane.f32.xlu0 %v248
          %v250 = vpop.xlane.xlu0 %249
          %v251 = vrot.slane %v250, 4
          %v252 = vmin.f32 %v250, %v251
          %v253 = vrot.slane %v252, 2
          %v254 = vmin.f32 %v252, %v253
          %v255 = vrot.slane %v254, 1
          %v256 = vmin.f32 %v254, %v255
          %s257 = vtos %v256
          %v258 = vstv %s257
          %v259 = vld [vmem:[#allocation4] sm:$0xff]
          %260 = vadd.xlane.f32.xlu0 %v259
          %v261 = vpop.xlane.xlu0 %260
          %v262 = vrot.slane %v261, 4
          %v263 = vadd.f32 %v261, %v262
          %v264 = vrot.slane %v263, 2
          %v265 = vadd.f32 %v263, %v264
          %v266 = vrot.slane %v265, 1
          %v267 = vadd.f32 %v265, %v266
          %s268 = vtos %v267
          %v269 = vstv %s268
          %v270 = vsub.f32 %v247, %v258
          %v271 = vmul.f32 %v269, 0.0009765625
          %v272 = vmul.f32 %v270, %v270
          %v273 = vrcp.pop %v271
          %v274 = vmul.f32 %v272, %v273
          %v275 = vlog2.pop %v274
          %v276 = vmul.f32 %v275, 0.6931472
          %v277 = vmul.f32 %v276, 0.4342945
          %v278 = vmul.f32 %v277, -10.0
          %279 = vst [vmem:[%s212] sm:$0x1] %v278
        $region44: #{tpu_custom_call.1} parent=27 // pred_fallthru
          _
        %s280 = sand.u32 %s98, 1
        %s281 = scalar_lea.sflag [#allocation7], %s280
        %s282 = sand.u32 %s98, 1
        %s283 = scalar_lea.vmem [#allocation10], %s282
        // Predicated region
        $region45: #{tpu_custom_call.1} parent=27 // pred_check
          %p284 = pneg %p108
        $region46: #{tpu_custom_call.1} parent=27 // pred_check_branch
          %286 = sbr.rel (%p284) target = $region48
        $region47: #{tpu_custom_call.1} parent=27 // pred_region
          %s288 = ssub.s32 16, 16
          %289 = vsyncadd %s281, %s288
          %s290 = smul.addr %s26, 16
          %s291 = scalar_lea.hbm %s2, %s290
          %s293 = sshll.u32 %s283, 4
          %s294 = int_to_ptr.vmem [resolvable:$true] %s293
          %296 = dma.vmem_to_hbm [thread:$0]  %s294, 16, %s291, %s281
        $region48: #{tpu_custom_call.1} parent=27 // pred_fallthru
          _
      $region28: #{tpu_custom_call.1} parent=5 // pred_fallthru
        _
      %p297 = scmp.le.s32.totalorder 2, %s17
      // Predicated region
      $region49: #{tpu_custom_call.1} parent=5 // pred_check
        %p298 = pneg %p297
      $region50: #{tpu_custom_call.1} parent=5 // pred_check_branch
        %300 = sbr.rel (%p298) target = $region52
      $region51: #{tpu_custom_call.1} parent=5 // pred_region
        %s301 = ssub.s32 %s17, 2
        // Predicated region
        $region53: #{tpu_custom_call.1} parent=51 // pred_check
          %p302 = pneg %p114
        $region54: #{tpu_custom_call.1} parent=51 // pred_check_branch
          %304 = sbr.rel (%p302) target = $region56
        $region55: #{tpu_custom_call.1} parent=51 // pred_region
          %s305 = sand.u32 %s99, 1
          %s306 = scalar_lea.sflag [#allocation7], %s305
          %s307 = sand.u32 %s99, 1
          %s308 = scalar_lea.vmem [#allocation10], %s307
          %309 = dma.done %s306, 16
        $region56: #{tpu_custom_call.1} parent=51 // pred_fallthru
          _
      $region52: #{tpu_custom_call.1} parent=5 // pred_fallthru
        _
    $region6: #{tpu_custom_call.1} parent=1 // loop_footer
      %s21 = sadd.s32 1, %s17
    $region7: #{tpu_custom_call.1} parent=1 // loop_footer_branch
      %16 = sbr.rel target = $region3
    $region8: #{tpu_custom_call.1} parent=1 // loop_exit
      _
    %310 = vsyncpa [#allocation6], 1
    %s311 = scalar_lea.sflag [#allocation6], 1
    %312 = vsyncpa %s311, 1
    %313 = vsyncpa [#allocation9], 1
    %s314 = scalar_lea.sflag [#allocation9], 1
    %315 = vsyncpa %s314, 1
    %316 = vsyncpa [#allocation7], 1
    %s317 = scalar_lea.sflag [#allocation7], 1
    %318 = vsyncpa %s317, 1

</llo_original>
